<compile_context>
chip_gen: v5e
topology: v5e:2x2
jax: 0.10.0
libtpu: 0.0.40
codegen_flags: <defaults>
</compile_context>

<pallas_src>
import numpy as np
import jax
import jax.numpy as jnp
from jax.experimental import pallas as pl
from jax.experimental.pallas import tpu as pltpu


# ----------------------------- Pallas kernel --------------------------------

def _fused_conv_block_kernel(x_ref, w1_ref, s1_ref, b1_ref,
                             w2_ref, s2_ref, b2_ref, o_ref):
    """Fused conv3x3+BN+ReLU (x2) on a block of `nb` images.

    x_ref:  (nb, H, W*Cin)     bf16  lane-dense input slab
    w1_ref: (3*W*Cin,  W*Cout) bf16  ky-folded block-tridiagonal conv1 weights
    w2_ref: (3*W*Cout, W*Cout) bf16  conv2 weights
    s*/b*:  (1, W*Cout)        f32   folded BN scale / (conv-bias + BN) bias
    o_ref:  (nb, H, W*Cout)    f32   output slab
    """
    nb, H, _ = x_ref.shape
    wcout = o_ref.shape[2]

    def conv3x3_bn_relu(x, w, s, b):
        # x: (nb, H, wc) bf16.  Build the (nb*H, 3*wc) LHS whose row h holds
        # [x[h-1] | x[h] | x[h+1]] (zeros at the image borders): this folds
        # both the vertical zero-padding and the three ky taps into K, so the
        # whole stage is a single MXU matmul with a f32 accumulator.
        wc = x.shape[-1]
        z = jnp.zeros((nb, 1, wc), x.dtype)
        up = jnp.concatenate([z, x[:, :H - 1, :]], axis=1)    # x[h-1], 0 at h=0
        dn = jnp.concatenate([x[:, 1:, :], z], axis=1)        # x[h+1], 0 at h=H-1
        lhs = jnp.concatenate([up, x, dn], axis=-1).reshape(nb * H, 3 * wc)
        acc = jnp.dot(lhs, w, preferred_element_type=jnp.float32)
        return jnp.maximum(acc * s + b, 0.0)                  # (nb*H, wcout) f32

    # stage 1: conv3x3 (pad=1) + BN(eval) + ReLU
    y1 = conv3x3_bn_relu(x_ref[...], w1_ref[...], s1_ref[...], b1_ref[...])
    # stage 2: intermediate never leaves VMEM/vregs
    y2 = conv3x3_bn_relu(y1.astype(jnp.bfloat16).reshape(nb, H, wcout),
                         w2_ref[...], s2_ref[...], b2_ref[...])
    o_ref[...] = y2.reshape(nb, H, wcout).astype(o_ref.dtype)


# -------------------------- parameter preparation ---------------------------

def _make_wide_conv_weights(w, W):
    """(3, 3, Cin, Cout) -> (3, W*Cin, W*Cout), block-tridiagonal in W.

    wide[ky, wp*Cin + ci, w*Cout + co] = w[ky, kx, ci, co] with kx = wp - w + 1
    (zero when |wp - w| > 1): folds the kx taps and the horizontal zero-padding
    of a stride-1 'same' conv into the weight matrix.
    """
    _, _, cin, cout = w.shape
    sel = np.zeros((3, W, W), np.float32)
    for kx in range(3):
        for wc in range(W):
            wp = wc + kx - 1
            if 0 <= wp < W:
                sel[kx, wp, wc] = 1.0
    wide = jnp.einsum('xpw,yxio->ypiwo', jnp.asarray(sel), w)
    return wide.reshape(3, W * cin, W * cout)


def _fold_bn(conv_b, bn, eps, W):
    """Eval-mode BN folded into per-channel scale/bias, tiled to (1, W*Cout)."""
    scale = bn["gamma"] / jnp.sqrt(bn["var"] + eps)
    bias = (conv_b - bn["mean"]) * scale + bn["beta"]
    return (jnp.tile(scale, W)[None, :].astype(jnp.float32),
            jnp.tile(bias, W)[None, :].astype(jnp.float32))


def prepare_conv_block_params(params, W, eps=1e-5):
    """One-time (inference) prep: wide ky/kx-folded bf16 weights + folded BN.

    Hoisted out of the jitted forward so the hot path is just the pallas_call.
    """
    cin = params["w1"].shape[2]
    cout = params["w1"].shape[3]
    w1w = _make_wide_conv_weights(params["w1"], W).reshape(3 * W * cin, W * cout)
    w2w = _make_wide_conv_weights(params["w2"], W).reshape(3 * W * cout, W * cout)
    s1, b1 = _fold_bn(params["b1"], params["bn1"], eps, W)
    s2, b2 = _fold_bn(params["b2"], params["bn2"], eps, W)
    return dict(w1w=w1w.astype(jnp.bfloat16), w2w=w2w.astype(jnp.bfloat16),
                s1=s1, b1=b1, s2=s2, b2=b2)


# ------------------------------ pallas wrapper -------------------------------

def _pick_nb(N, H, max_rows=1024):
    """Largest divisor nb of N such that nb*H rows keep the working set small
    while still leaving >= 2 grid steps when N >= 2 (both v7x TCs get work)."""
    best = 1
    for nb in range(1, N + 1):
        if N % nb:
            continue
        if nb * H > max_rows:
            continue
        if N >= 2 and (N // nb) < 2:
            continue
        best = nb
    return best


def _conv_block_pallas(x_wide, w1w, s1, b1, w2w, s2, b2):
    N, H, wcin = x_wide.shape
    wcout = w1w.shape[1]
    nb = _pick_nb(N, H)
    return pl.pallas_call(
        _fused_conv_block_kernel,
        out_shape=jax.ShapeDtypeStruct((N, H, wcout), jnp.float32),
        grid_spec=pltpu.PrefetchScalarGridSpec(
            num_scalar_prefetch=0,
            grid=(N // nb,),
            in_specs=[
                pl.BlockSpec((nb, H, wcin), lambda n: (n, 0, 0)),
                pl.BlockSpec((3 * wcin, wcout), lambda n: (0, 0)),
                pl.BlockSpec((1, wcout), lambda n: (0, 0)),
                pl.BlockSpec((1, wcout), lambda n: (0, 0)),
                pl.BlockSpec((3 * wcout, wcout), lambda n: (0, 0)),
                pl.BlockSpec((1, wcout), lambda n: (0, 0)),
                pl.BlockSpec((1, wcout), lambda n: (0, 0)),
            ],
            out_specs=pl.BlockSpec((nb, H, wcout), lambda n: (n, 0, 0)),
        ),
        compiler_params=pltpu.CompilerParams(
            dimension_semantics=("parallel",)),
    )(x_wide, w1w, s1, b1, w2w, s2, b2)


@jax.jit
def conv_block_forward(x_nchw, prep):
    """Matches conv_block.forward: NCHW in, NCHW out (like PyTorch)."""
    N, Cin, H, W = x_nchw.shape
    wcout = prep["w1w"].shape[1]
    Cout = wcout // W

    # NCHW -> NHWC -> lane-dense (N, H, W*Cin) bf16 slab.
    x_wide = (jnp.transpose(x_nchw, (0, 2, 3, 1))
              .reshape(N, H, W * Cin).astype(jnp.bfloat16))

    out_wide = _conv_block_pallas(x_wide, prep["w1w"], prep["s1"], prep["b1"],
                                  prep["w2w"], prep["s2"], prep["b2"])
    out = out_wide.reshape(N, H, W, Cout)
    return jnp.transpose(out, (0, 3, 1, 2))  # NHWC -> NCHW


# ------------------------------ init / reference ----------------------------

def init_conv_block_params(key, ch_in, ch_out):
    """Deterministic parameter init matching the nn.Module shapes."""
    k1, k2, k3, k4 = jax.random.split(key, 4)

    def conv_init(kw, kb, cin, cout):
        fan_in = cin * 3 * 3
        bound = 1.0 / jnp.sqrt(fan_in)
        w = jax.random.uniform(kw, (3, 3, cin, cout), jnp.float32, -bound, bound)
        b = jax.random.uniform(kb, (cout,), jnp.float32, -bound, bound)
        return w, b

    w1, b1 = conv_init(k1, k2, ch_in, ch_out)
    w2, b2 = conv_init(k3, k4, ch_out, ch_out)

    def bn_init(c):
        return dict(gamma=jnp.ones((c,), jnp.float32),
                    beta=jnp.zeros((c,), jnp.float32),
                    mean=jnp.zeros((c,), jnp.float32),
                    var=jnp.ones((c,), jnp.float32))

    return dict(w1=w1, b1=b1, bn1=bn_init(ch_out),
                w2=w2, b2=b2, bn2=bn_init(ch_out))


def conv_block_reference(x_nchw, params, eps=1e-5):
    """Pure-JAX reference (XLA conv) for correctness checking."""
    def layer(x, w, b, bn):
        w_oihw = jnp.transpose(w, (3, 2, 0, 1))
        y = jax.lax.conv_general_dilated(
            x, w_oihw, window_strides=(1, 1), padding=((1, 1), (1, 1)),
            dimension_numbers=("NCHW", "OIHW", "NCHW"),
            precision=jax.lax.Precision.HIGHEST)
        y = y + b[None, :, None, None]
        scale = bn["gamma"] / jnp.sqrt(bn["var"] + eps)
        y = ((y - bn["mean"][None, :, None, None]) * scale[None, :, None, None]
             + bn["beta"][None, :, None, None])
        return jnp.maximum(y, 0.0)

    x = layer(x_nchw, params["w1"], params["b1"], params["bn1"])
    x = layer(x, params["w2"], params["b2"], params["bn2"])
    return x


if __name__ == "__main__":
    key = jax.random.PRNGKey(0)
    kx, kp = jax.random.split(key)

    N, CH_IN, H, W = 2, 4, 16, 16
    CH_OUT = 8

    x = jax.random.normal(kx, (N, CH_IN, H, W), dtype=jnp.float32)
    params = init_conv_block_params(kp, CH_IN, CH_OUT)

    # One-time parameter prep (outside the jitted hot path).
    prep = prepare_conv_block_params(params, W)

    out = conv_block_forward(x, prep)
    out = jax.block_until_ready(out)

    assert out.shape == (N, CH_OUT, H, W), out.shape
    assert bool(jnp.all(out >= 0.0))          # ReLU output is non-negative
    assert bool(jnp.all(jnp.isfinite(out)))

    # Validate against a pure-JAX f32 reference (bf16 MXU operands => tolerance).
    ref = jax.block_until_ready(conv_block_reference(x, params))
    max_err = float(jnp.max(jnp.abs(out - ref)))
    assert max_err < 5e-2, f"mismatch vs reference: {max_err}"

    print("KERNEL_OK")
</pallas_src>

<mosaic_0001>
module attributes {stable_mosaic.version = 11 : i64} {
  func.func @_fused_conv_block_kernel(%arg0: i32, %arg1: memref<1x16x64xbf16, #tpu.memory_space<vmem>>, %arg2: memref<192x128xbf16, #tpu.memory_space<vmem>>, %arg3: memref<1x128xf32, #tpu.memory_space<vmem>>, %arg4: memref<1x128xf32, #tpu.memory_space<vmem>>, %arg5: memref<384x128xbf16, #tpu.memory_space<vmem>>, %arg6: memref<1x128xf32, #tpu.memory_space<vmem>>, %arg7: memref<1x128xf32, #tpu.memory_space<vmem>>, %arg8: memref<1x16x128xf32, #tpu.memory_space<vmem>>) attributes {dimension_semantics = [#tpu.dimension_semantics<parallel>], iteration_bounds = array<i64: 2>, scalar_prefetch = 0 : i64, scratch_operands = 0 : i64, tpu.core_type = #tpu.core_type<tc>, window_params = [{transform_indices = @transform_0, window_bounds = array<i64: 1, 16, 64>}, {pipeline_mode = #tpu.pipeline_mode<synchronous>, transform_indices = @transform_1, window_bounds = array<i64: 192, 128>}, {pipeline_mode = #tpu.pipeline_mode<synchronous>, transform_indices = @transform_2, window_bounds = array<i64: 1, 128>}, {pipeline_mode = #tpu.pipeline_mode<synchronous>, transform_indices = @transform_3, window_bounds = array<i64: 1, 128>}, {pipeline_mode = #tpu.pipeline_mode<synchronous>, transform_indices = @transform_4, window_bounds = array<i64: 384, 128>}, {pipeline_mode = #tpu.pipeline_mode<synchronous>, transform_indices = @transform_5, window_bounds = array<i64: 1, 128>}, {pipeline_mode = #tpu.pipeline_mode<synchronous>, transform_indices = @transform_6, window_bounds = array<i64: 1, 128>}, {transform_indices = @transform_7, window_bounds = array<i64: 1, 16, 128>}]} {
    %c0 = arith.constant 0 : index
    %c0_0 = arith.constant 0 : index
    %c0_1 = arith.constant 0 : index
    %0 = vector.load %arg1[%c0, %c0_0, %c0_1] : memref<1x16x64xbf16, #tpu.memory_space<vmem>>, vector<1x16x64xbf16>
    %c0_2 = arith.constant 0 : index
    %c0_3 = arith.constant 0 : index
    %1 = vector.load %arg2[%c0_2, %c0_3] : memref<192x128xbf16, #tpu.memory_space<vmem>>, vector<192x128xbf16>
    %c0_4 = arith.constant 0 : index
    %c0_5 = arith.constant 0 : index
    %2 = vector.load %arg3[%c0_4, %c0_5] : memref<1x128xf32, #tpu.memory_space<vmem>>, vector<1x128xf32>
    %c0_6 = arith.constant 0 : index
    %c0_7 = arith.constant 0 : index
    %3 = vector.load %arg4[%c0_6, %c0_7] : memref<1x128xf32, #tpu.memory_space<vmem>>, vector<1x128xf32>
    %cst = arith.constant 0.000000e+00 : bf16
    %4 = vector.broadcast %cst : bf16 to vector<1x1x64xbf16>
    %5 = vector.extract_strided_slice %0 {offsets = [0, 0, 0], sizes = [1, 15, 64], strides = [1, 1, 1]} : vector<1x16x64xbf16> to vector<1x15x64xbf16>
    %6 = tpu.concatenate %4, %5 in 1 : vector<1x1x64xbf16>, vector<1x15x64xbf16> -> vector<1x16x64xbf16>
    %7 = vector.extract_strided_slice %0 {offsets = [0, 1, 0], sizes = [1, 15, 64], strides = [1, 1, 1]} : vector<1x16x64xbf16> to vector<1x15x64xbf16>
    %8 = tpu.concatenate %7, %4 in 1 : vector<1x15x64xbf16>, vector<1x1x64xbf16> -> vector<1x16x64xbf16>
    %9 = tpu.concatenate %6, %0, %8 in 2 : vector<1x16x64xbf16>, vector<1x16x64xbf16>, vector<1x16x64xbf16> -> vector<1x16x192xbf16>
    %10 = vector.shape_cast %9 : vector<1x16x192xbf16> to vector<16x192xbf16>
    %cst_8 = arith.constant dense<0.000000e+00> : vector<16x128xf32>
    %11 = tpu.matmul %10, %1, %cst_8 {dimension_numbers = #tpu.dot_dimension_numbers<[1], [0], [0], [1], [0, 0, 1, 1], [], []>} : vector<16x192xbf16>, vector<192x128xbf16>, vector<16x128xf32> -> vector<16x128xf32>
    %12 = vector.broadcast %2 : vector<1x128xf32> to vector<16x128xf32>
    %13 = arith.mulf %11, %12 : vector<16x128xf32>
    %14 = vector.broadcast %3 : vector<1x128xf32> to vector<16x128xf32>
    %15 = arith.addf %13, %14 : vector<16x128xf32>
    %cst_9 = arith.constant 0.000000e+00 : f32
    %16 = vector.broadcast %cst_9 : f32 to vector<16x128xf32>
    %17 = arith.maximumf %15, %16 : vector<16x128xf32>
    %18 = arith.truncf %17 : vector<16x128xf32> to vector<16x128xbf16>
    %19 = vector.shape_cast %18 : vector<16x128xbf16> to vector<1x16x128xbf16>
    %c0_10 = arith.constant 0 : index
    %c0_11 = arith.constant 0 : index
    %20 = vector.load %arg5[%c0_10, %c0_11] : memref<384x128xbf16, #tpu.memory_space<vmem>>, vector<384x128xbf16>
    %c0_12 = arith.constant 0 : index
    %c0_13 = arith.constant 0 : index
    %21 = vector.load %arg6[%c0_12, %c0_13] : memref<1x128xf32, #tpu.memory_space<vmem>>, vector<1x128xf32>
    %c0_14 = arith.constant 0 : index
    %c0_15 = arith.constant 0 : index
    %22 = vector.load %arg7[%c0_14, %c0_15] : memref<1x128xf32, #tpu.memory_space<vmem>>, vector<1x128xf32>
    %cst_16 = arith.constant 0.000000e+00 : bf16
    %23 = vector.broadcast %cst_16 : bf16 to vector<1x1x128xbf16>
    %24 = vector.extract_strided_slice %19 {offsets = [0, 0, 0], sizes = [1, 15, 128], strides = [1, 1, 1]} : vector<1x16x128xbf16> to vector<1x15x128xbf16>
    %25 = tpu.concatenate %23, %24 in 1 : vector<1x1x128xbf16>, vector<1x15x128xbf16> -> vector<1x16x128xbf16>
    %26 = vector.extract_strided_slice %19 {offsets = [0, 1, 0], sizes = [1, 15, 128], strides = [1, 1, 1]} : vector<1x16x128xbf16> to vector<1x15x128xbf16>
    %27 = tpu.concatenate %26, %23 in 1 : vector<1x15x128xbf16>, vector<1x1x128xbf16> -> vector<1x16x128xbf16>
    %28 = tpu.concatenate %25, %19, %27 in 2 : vector<1x16x128xbf16>, vector<1x16x128xbf16>, vector<1x16x128xbf16> -> vector<1x16x384xbf16>
    %29 = vector.shape_cast %28 : vector<1x16x384xbf16> to vector<16x384xbf16>
    %cst_17 = arith.constant dense<0.000000e+00> : vector<16x128xf32>
    %30 = tpu.matmul %29, %20, %cst_17 {dimension_numbers = #tpu.dot_dimension_numbers<[1], [0], [0], [1], [0, 0, 1, 1], [], []>} : vector<16x384xbf16>, vector<384x128xbf16>, vector<16x128xf32> -> vector<16x128xf32>
    %31 = vector.broadcast %21 : vector<1x128xf32> to vector<16x128xf32>
    %32 = arith.mulf %30, %31 : vector<16x128xf32>
    %33 = vector.broadcast %22 : vector<1x128xf32> to vector<16x128xf32>
    %34 = arith.addf %32, %33 : vector<16x128xf32>
    %cst_18 = arith.constant 0.000000e+00 : f32
    %35 = vector.broadcast %cst_18 : f32 to vector<16x128xf32>
    %36 = arith.maximumf %34, %35 : vector<16x128xf32>
    %37 = vector.shape_cast %36 : vector<16x128xf32> to vector<1x16x128xf32>
    %c0_19 = arith.constant 0 : index
    %c0_20 = arith.constant 0 : index
    %c0_21 = arith.constant 0 : index
    %38 = vector.load %arg8[%c0_19, %c0_20, %c0_21] : memref<1x16x128xf32, #tpu.memory_space<vmem>>, vector<1x16x128xf32>
    tpu.vector_store %arg8[%c0_19, %c0_20, %c0_21], %37 {strides = array<i32>} : memref<1x16x128xf32, #tpu.memory_space<vmem>>, vector<1x16x128xf32>,
    return
  }
  func.func @transform_0(%arg0: i32) -> (i32, i32, i32) {
    %c0_i32 = arith.constant 0 : i32
    %c0_i32_0 = arith.constant 0 : i32
    %c0_i32_1 = arith.constant 0 : i32
    return %arg0, %c0_i32, %c0_i32_0 : i32, i32, i32
  }
  func.func @transform_1(%arg0: i32) -> (i32, i32) {
    %c0_i32 = arith.constant 0 : i32
    %c0_i32_0 = arith.constant 0 : i32
    %c0_i32_1 = arith.constant 0 : i32
    return %c0_i32, %c0_i32_0 : i32, i32
  }
  func.func @transform_2(%arg0: i32) -> (i32, i32) {
    %c0_i32 = arith.constant 0 : i32
    %c0_i32_0 = arith.constant 0 : i32
    %c0_i32_1 = arith.constant 0 : i32
    return %c0_i32, %c0_i32_0 : i32, i32
  }
  func.func @transform_3(%arg0: i32) -> (i32, i32) {
    %c0_i32 = arith.constant 0 : i32
    %c0_i32_0 = arith.constant 0 : i32
    %c0_i32_1 = arith.constant 0 : i32
    return %c0_i32, %c0_i32_0 : i32, i32
  }
  func.func @transform_4(%arg0: i32) -> (i32, i32) {
    %c0_i32 = arith.constant 0 : i32
    %c0_i32_0 = arith.constant 0 : i32
    %c0_i32_1 = arith.constant 0 : i32
    return %c0_i32, %c0_i32_0 : i32, i32
  }
  func.func @transform_5(%arg0: i32) -> (i32, i32) {
    %c0_i32 = arith.constant 0 : i32
    %c0_i32_0 = arith.constant 0 : i32
    %c0_i32_1 = arith.constant 0 : i32
    return %c0_i32, %c0_i32_0 : i32, i32
  }
  func.func @transform_6(%arg0: i32) -> (i32, i32) {
    %c0_i32 = arith.constant 0 : i32
    %c0_i32_0 = arith.constant 0 : i32
    %c0_i32_1 = arith.constant 0 : i32
    return %c0_i32, %c0_i32_0 : i32, i32
  }
  func.func @transform_7(%arg0: i32) -> (i32, i32, i32) {
    %c0_i32 = arith.constant 0 : i32
    %c0_i32_0 = arith.constant 0 : i32
    %c0_i32_1 = arith.constant 0 : i32
    return %arg0, %c0_i32, %c0_i32_0 : i32, i32, i32
  }
}

</mosaic_0001>

<llo_original>
// kernel: conv_block_forward.1
$region0: #{conv_block_forward.1}
  #allocation0 [shape = 'u32[]', space=smem, size = 0x4, offset = 0x4, fixed_abs, tag = 'smem constant byte address 0x4 - core index']
  #allocation1 [shape = 'u32[72,128]{1,0:T(1,128)}', space=vmem, size = 0x9000, scoped, tag = 'internal scratch']
  %s0 = inlined_call_operand.vmem [shape: bf16[2,16,64], index: 0, kind: input, shape index: {}]
  %s1 = inlined_call_operand.vmem [shape: bf16[192,128], index: 1, kind: input, shape index: {}]
  %s2 = inlined_call_operand.vmem [shape: f32[1,128], index: 2, kind: input, shape index: {}]
  %s3 = inlined_call_operand.vmem [shape: f32[1,128], index: 3, kind: input, shape index: {}]
  %s4 = inlined_call_operand.vmem [shape: bf16[384,128], index: 4, kind: input, shape index: {}]
  %s5 = inlined_call_operand.vmem [shape: f32[1,128], index: 5, kind: input, shape index: {}]
  %s6 = inlined_call_operand.vmem [shape: f32[1,128], index: 6, kind: input, shape index: {}]
  %s7 = inlined_call_operand.vmem [shape: f32[2,16,128], index: 7, kind: output, shape index: {}]
  %s8 = sld [smem:[#allocation0]]
  $region61: #{conv_block_forward.1} parent=0
    _
  %s10 = ssub.s32 1, %s8
  %s11 = scalar_select 0, %s10, %s8
  loop: start=0, step=1, limit=4
  $region2: #{conv_block_forward.1} parent=0 // loop_pre_header
    _
  $region3: #{conv_block_forward.1} parent=0 // loop_header
    %s13 = sphi 0, %s17
    %p14 = scmp.ge.s32.totalorder %s13, 4
    %s23 = sphi 0, %s25
    %s26 = sphi 0, %s23
    %s27 = sphi 0, %s26
    %s43 = sphi 0, %s27
    %s47 = sphi 0, %s47
    %s49 = sphi 0, %s47
    %s50 = sphi 0, %s49
    %s64 = sphi 0, %s50
    %s68 = sphi 0, %s68
    %s70 = sphi 0, %s68
    %s71 = sphi 0, %s70
    %s85 = sphi 0, %s71
    %s89 = sphi 0, %s89
    %s91 = sphi 0, %s89
    %s92 = sphi 0, %s91
    %s106 = sphi 0, %s92
    %s110 = sphi 0, %s110
    %s112 = sphi 0, %s110
    %s113 = sphi 0, %s112
    %s127 = sphi 0, %s113
    %s131 = sphi 0, %s131
    %s133 = sphi 0, %s131
    %s134 = sphi 0, %s133
    %s148 = sphi 0, %s134
    %s152 = sphi 0, %s152
    %s154 = sphi 0, %s152
    %s155 = sphi 0, %s154
    %s169 = sphi 0, %s155
    %s175 = sphi 0, %s177
    %s178 = sphi 0, %s175
    %s179 = sphi 0, %s178
    %s195 = sphi 0, %s179
  $region4: #{conv_block_forward.1} parent=0 // loop_header_branch
    %16 = sbr.rel (%p14) target = $region8
  $region5: #{conv_block_forward.1} parent=0 // loop_body
    %s18 = ssub.s32 %s13, 1
    %s19 = ssub.s32 %s13, 2
    %s20 = sadd.s32 %s13, 1
    %s21 = ssub.s32 %s13, %s20
    %p22 = scmp.eq.s32.totalorder %s21, 0
    %s24 = sadd.s32 %s23, 1
    %s25 = scalar_select %p22, %s23, %s24
    %p28 = pneg %p22
    %p29 = scmp.eq.s32.totalorder %s13, 1
    %p30 = por %p28, %p29
    %p31 = scmp.ne.s32.totalorder %s23, %s26
    %p32 = scmp.eq.s32.totalorder %s13, 0
    %p33 = por %p31, %p32
    %p34 = scmp.ne.s32.totalorder %s23, %s26
    %p35 = scmp.eq.s32.totalorder %s18, 1
    %p36 = por %p34, %p35
    %p37 = scmp.ne.s32.totalorder %s26, %s27
    %p38 = scmp.eq.s32.totalorder %s18, 0
    %p39 = por %p37, %p38
    %p40 = scmp.ne.s32.totalorder %s26, %s27
    %p41 = scmp.eq.s32.totalorder %s19, 1
    %p42 = por %p40, %p41
    %p44 = scmp.ne.s32.totalorder %s27, %s43
    %p45 = scmp.eq.s32.totalorder %s19, 0
    %p46 = por %p44, %p45
    %s48 = sadd.s32 %s47, 1
    %p51 = scmp.eq.s32.totalorder %s13, 1
    %p52 = scmp.ne.s32.totalorder %s47, %s49
    %p53 = scmp.eq.s32.totalorder %s13, 0
    %p54 = por %p52, %p53
    %p55 = scmp.ne.s32.totalorder %s47, %s49
    %p56 = scmp.eq.s32.totalorder %s18, 1
    %p57 = por %p55, %p56
    %p58 = scmp.ne.s32.totalorder %s49, %s50
    %p59 = scmp.eq.s32.totalorder %s18, 0
    %p60 = por %p58, %p59
    %p61 = scmp.ne.s32.totalorder %s49, %s50
    %p62 = scmp.eq.s32.totalorder %s19, 1
    %p63 = por %p61, %p62
    %p65 = scmp.ne.s32.totalorder %s50, %s64
    %p66 = scmp.eq.s32.totalorder %s19, 0
    %p67 = por %p65, %p66
    %s69 = sadd.s32 %s68, 1
    %p72 = scmp.eq.s32.totalorder %s13, 1
    %p73 = scmp.ne.s32.totalorder %s68, %s70
    %p74 = scmp.eq.s32.totalorder %s13, 0
    %p75 = por %p73, %p74
    %p76 = scmp.ne.s32.totalorder %s68, %s70
    %p77 = scmp.eq.s32.totalorder %s18, 1
    %p78 = por %p76, %p77
    %p79 = scmp.ne.s32.totalorder %s70, %s71
    %p80 = scmp.eq.s32.totalorder %s18, 0
    %p81 = por %p79, %p80
    %p82 = scmp.ne.s32.totalorder %s70, %s71
    %p83 = scmp.eq.s32.totalorder %s19, 1
    %p84 = por %p82, %p83
    %p86 = scmp.ne.s32.totalorder %s71, %s85
    %p87 = scmp.eq.s32.totalorder %s19, 0
    %p88 = por %p86, %p87
    %s90 = sadd.s32 %s89, 1
    %p93 = scmp.eq.s32.totalorder %s13, 1
    %p94 = scmp.ne.s32.totalorder %s89, %s91
    %p95 = scmp.eq.s32.totalorder %s13, 0
    %p96 = por %p94, %p95
    %p97 = scmp.ne.s32.totalorder %s89, %s91
    %p98 = scmp.eq.s32.totalorder %s18, 1
    %p99 = por %p97, %p98
    %p100 = scmp.ne.s32.totalorder %s91, %s92
    %p101 = scmp.eq.s32.totalorder %s18, 0
    %p102 = por %p100, %p101
    %p103 = scmp.ne.s32.totalorder %s91, %s92
    %p104 = scmp.eq.s32.totalorder %s19, 1
    %p105 = por %p103, %p104
    %p107 = scmp.ne.s32.totalorder %s92, %s106
    %p108 = scmp.eq.s32.totalorder %s19, 0
    %p109 = por %p107, %p108
    %s111 = sadd.s32 %s110, 1
    %p114 = scmp.eq.s32.totalorder %s13, 1
    %p115 = scmp.ne.s32.totalorder %s110, %s112
    %p116 = scmp.eq.s32.totalorder %s13, 0
    %p117 = por %p115, %p116
    %p118 = scmp.ne.s32.totalorder %s110, %s112
    %p119 = scmp.eq.s32.totalorder %s18, 1
    %p120 = por %p118, %p119
    %p121 = scmp.ne.s32.totalorder %s112, %s113
    %p122 = scmp.eq.s32.totalorder %s18, 0
    %p123 = por %p121, %p122
    %p124 = scmp.ne.s32.totalorder %s112, %s113
    %p125 = scmp.eq.s32.totalorder %s19, 1
    %p126 = por %p124, %p125
    %p128 = scmp.ne.s32.totalorder %s113, %s127
    %p129 = scmp.eq.s32.totalorder %s19, 0
    %p130 = por %p128, %p129
    %s132 = sadd.s32 %s131, 1
    %p135 = scmp.eq.s32.totalorder %s13, 1
    %p136 = scmp.ne.s32.totalorder %s131, %s133
    %p137 = scmp.eq.s32.totalorder %s13, 0
    %p138 = por %p136, %p137
    %p139 = scmp.ne.s32.totalorder %s131, %s133
    %p140 = scmp.eq.s32.totalorder %s18, 1
    %p141 = por %p139, %p140
    %p142 = scmp.ne.s32.totalorder %s133, %s134
    %p143 = scmp.eq.s32.totalorder %s18, 0
    %p144 = por %p142, %p143
    %p145 = scmp.ne.s32.totalorder %s133, %s134
    %p146 = scmp.eq.s32.totalorder %s19, 1
    %p147 = por %p145, %p146
    %p149 = scmp.ne.s32.totalorder %s134, %s148
    %p150 = scmp.eq.s32.totalorder %s19, 0
    %p151 = por %p149, %p150
    %s153 = sadd.s32 %s152, 1
    %p156 = scmp.eq.s32.totalorder %s13, 1
    %p157 = scmp.ne.s32.totalorder %s152, %s154
    %p158 = scmp.eq.s32.totalorder %s13, 0
    %p159 = por %p157, %p158
    %p160 = scmp.ne.s32.totalorder %s152, %s154
    %p161 = scmp.eq.s32.totalorder %s18, 1
    %p162 = por %p160, %p161
    %p163 = scmp.ne.s32.totalorder %s154, %s155
    %p164 = scmp.eq.s32.totalorder %s18, 0
    %p165 = por %p163, %p164
    %p166 = scmp.ne.s32.totalorder %s154, %s155
    %p167 = scmp.eq.s32.totalorder %s19, 1
    %p168 = por %p166, %p167
    %p170 = scmp.ne.s32.totalorder %s155, %s169
    %p171 = scmp.eq.s32.totalorder %s19, 0
    %p172 = por %p170, %p171
    %s173 = ssub.s32 %s13, %s20
    %p174 = scmp.eq.s32.totalorder %s173, 0
    %s176 = sadd.s32 %s175, 1
    %s177 = scalar_select %p174, %s175, %s176
    %p180 = pneg %p174
    %p181 = scmp.eq.s32.totalorder %s13, 1
    %p182 = por %p180, %p181
    %p183 = scmp.ne.s32.totalorder %s175, %s178
    %p184 = scmp.eq.s32.totalorder %s13, 0
    %p185 = por %p183, %p184
    %p186 = scmp.ne.s32.totalorder %s175, %s178
    %p187 = scmp.eq.s32.totalorder %s18, 1
    %p188 = por %p186, %p187
    %p189 = scmp.ne.s32.totalorder %s178, %s179
    %p190 = scmp.eq.s32.totalorder %s18, 0
    %p191 = por %p189, %p190
    %p192 = scmp.ne.s32.totalorder %s178, %s179
    %p193 = scmp.eq.s32.totalorder %s19, 1
    %p194 = por %p192, %p193
    %p196 = scmp.ne.s32.totalorder %s179, %s195
    %p197 = scmp.eq.s32.totalorder %s19, 0
    %p198 = por %p196, %p197
    %p199 = scmp.le.s32.totalorder 1, %s13
    %p200 = scmp.lt.s32.totalorder %s13, 3
    %p201 = pnand %p199, %p200
    %p202 = pneg %p201
    // Predicated region
    $region9: #{conv_block_forward.1} parent=5 // pred_check
      _
    $region10: #{conv_block_forward.1} parent=5 // pred_check_branch
      %204 = sbr.rel (%p201) target = $region12
    $region11: #{conv_block_forward.1} parent=5 // pred_region
      %s205 = ssub.s32 %s13, 1
      // Predicated region
      $region13: #{conv_block_forward.1} parent=11 // pred_check
        %p206 = pneg %p60
      $region14: #{conv_block_forward.1} parent=11 // pred_check_branch
        %208 = sbr.rel (%p206) target = $region16
      $region15: #{conv_block_forward.1} parent=11 // pred_region
        _
      $region16: #{conv_block_forward.1} parent=11 // pred_fallthru
        _
      // Predicated region
      $region17: #{conv_block_forward.1} parent=11 // pred_check
        %p209 = pneg %p81
      $region18: #{conv_block_forward.1} parent=11 // pred_check_branch
        %211 = sbr.rel (%p209) target = $region20
      $region19: #{conv_block_forward.1} parent=11 // pred_region
        _
      $region20: #{conv_block_forward.1} parent=11 // pred_fallthru
        _
      // Predicated region
      $region21: #{conv_block_forward.1} parent=11 // pred_check
        %p212 = pneg %p102
      $region22: #{conv_block_forward.1} parent=11 // pred_check_branch
        %214 = sbr.rel (%p212) target = $region24
      $region23: #{conv_block_forward.1} parent=11 // pred_region
        _
      $region24: #{conv_block_forward.1} parent=11 // pred_fallthru
        _
      // Predicated region
      $region25: #{conv_block_forward.1} parent=11 // pred_check
        %p215 = pneg %p123
      $region26: #{conv_block_forward.1} parent=11 // pred_check_branch
        %217 = sbr.rel (%p215) target = $region28
      $region27: #{conv_block_forward.1} parent=11 // pred_region
        _
      $region28: #{conv_block_forward.1} parent=11 // pred_fallthru
        _
      // Predicated region
      $region29: #{conv_block_forward.1} parent=11 // pred_check
        %p218 = pneg %p144
      $region30: #{conv_block_forward.1} parent=11 // pred_check_branch
        %220 = sbr.rel (%p218) target = $region32
      $region31: #{conv_block_forward.1} parent=11 // pred_region
        _
      $region32: #{conv_block_forward.1} parent=11 // pred_fallthru
        _
      // Predicated region
      $region33: #{conv_block_forward.1} parent=11 // pred_check
        %p221 = pneg %p165
      $region34: #{conv_block_forward.1} parent=11 // pred_check_branch
        %223 = sbr.rel (%p221) target = $region36
      $region35: #{conv_block_forward.1} parent=11 // pred_region
        _
      $region36: #{conv_block_forward.1} parent=11 // pred_fallthru
        _
    $region12: #{conv_block_forward.1} parent=5 // pred_fallthru
      _
    %p224 = scmp.lt.s32.totalorder %s13, 2
    // Predicated region
    $region37: #{conv_block_forward.1} parent=5 // pred_check
      %p225 = pneg %p224
    $region38: #{conv_block_forward.1} parent=5 // pred_check_branch
      %227 = sbr.rel (%p225) target = $region40
    $region39: #{conv_block_forward.1} parent=5 // pred_region
      // Predicated region
      $region41: #{conv_block_forward.1} parent=39 // pred_check
        %p228 = pneg %p33
      $region42: #{conv_block_forward.1} parent=39 // pred_check_branch
        %230 = sbr.rel (%p228) target = $region44
      $region43: #{conv_block_forward.1} parent=39 // pred_region
        %p231 = scmp.lt.s32.totalorder %s13, 1
        %s232 = scalar_select %p231, %s13, 1
        %s233 = smul.addr %s232, 2
        %s234 = smul.addr %s233, 4
        %s235 = scalar_lea.vmem %s0, %s234
      $region44: #{conv_block_forward.1} parent=39 // pred_fallthru
        _
    $region40: #{conv_block_forward.1} parent=5 // pred_fallthru
      _
    %p236 = scmp.le.s32.totalorder 1, %s13
    %p237 = scmp.lt.s32.totalorder %s13, 3
    %p238 = pnand %p236, %p237
    %p239 = pneg %p238
    // Predicated region
    $region45: #{conv_block_forward.1} parent=5 // pred_check
      _
    $region46: #{conv_block_forward.1} parent=5 // pred_check_branch
      %241 = sbr.rel (%p238) target = $region48
    $region47: #{conv_block_forward.1} parent=5 // pred_region
      %s242 = ssub.s32 %s13, 1
      %p243 = scmp.lt.s32.totalorder %s18, 1
      %s244 = scalar_select %p243, %s18, 1
      %s245 = smul.addr %s244, 2
      %s246 = smul.addr %s245, 4
      %s247 = scalar_lea.vmem %s0, %s246
      %p248 = pneg %p39
      %p249 = pneg %p36
      %p250 = pneg %p60
      %p251 = pneg %p57
      %p252 = pneg %p81
      %p253 = pneg %p78
      %p254 = pneg %p102
      %p255 = pneg %p99
      %p256 = pneg %p123
      %p257 = pneg %p120
      %p258 = pneg %p144
      %p259 = pneg %p141
      %p260 = pneg %p165
      %p261 = pneg %p162
      %p262 = pneg %p191
      %p263 = pneg %p188
      %p264 = scmp.lt.s32.totalorder %s18, 1
      %s265 = scalar_select %p264, %s18, 1
      %s266 = smul.addr %s265, 2
      %s267 = smul.addr %s266, 8
      %s268 = scalar_lea.vmem %s7, %s267
      %p269 = scmp.lt.s32.totalorder %s18, 1
      %s270 = scalar_select %p269, %s18, 1
      %s271 = smul.addr %s270, 2
      %s272 = smul.addr %s271, 4
      %s273 = scalar_lea.vmem %s0, %s272
      %p274 = scmp.lt.s32.totalorder %s18, 1
      %s275 = scalar_select %p274, %s18, 1
      %s276 = smul.addr %s275, 2
      %s277 = smul.addr %s276, 8
      %s278 = scalar_lea.vmem %s7, %s277
      %v280 = vld [vmem:[%s273] sm:$0xf]
      %v281 = vld [vmem:[%s273 + $0x4] sm:$0xf]
      %v282 = vld [vmem:[%s1] sm:$0xf]
      %v283 = vld [vmem:[%s1 + $0x4] sm:$0xf]
      %v284 = vld [vmem:[%s1 + $0x8] sm:$0xf]
      %v285 = vld [vmem:[%s1 + $0xc] sm:$0xf]
      %v286 = vld [vmem:[%s1 + $0x10] sm:$0xf]
      %v287 = vld [vmem:[%s1 + $0x14] sm:$0xf]
      %v288 = vld [vmem:[%s1 + $0x18] sm:$0xf]
      %v289 = vld [vmem:[%s1 + $0x1c] sm:$0xf]
      %v290 = vld [vmem:[%s1 + $0x20] sm:$0xf]
      %v291 = vld [vmem:[%s1 + $0x24] sm:$0xf]
      %v292 = vld [vmem:[%s1 + $0x28] sm:$0xf]
      %v293 = vld [vmem:[%s1 + $0x2c] sm:$0xf]
      %v294 = vld [vmem:[%s1 + $0x30] sm:$0xf]
      %v295 = vld [vmem:[%s1 + $0x34] sm:$0xf]
      %v296 = vld [vmem:[%s1 + $0x38] sm:$0xf]
      %v297 = vld [vmem:[%s1 + $0x3c] sm:$0xf]
      %v298 = vld [vmem:[%s1 + $0x40] sm:$0xf]
      %v299 = vld [vmem:[%s1 + $0x44] sm:$0xf]
      %v300 = vld [vmem:[%s1 + $0x48] sm:$0xf]
      %v301 = vld [vmem:[%s1 + $0x4c] sm:$0xf]
      %v302 = vld [vmem:[%s1 + $0x50] sm:$0xf]
      %v303 = vld [vmem:[%s1 + $0x54] sm:$0xf]
      %v304 = vld [vmem:[%s1 + $0x58] sm:$0xf]
      %v305 = vld [vmem:[%s1 + $0x5c] sm:$0xf]
      %v306 = vld [vmem:[%s2] sm:$0x1]
      %v307 = vld [vmem:[%s3] sm:$0x1]
      %v310 = vunpack.c.l.b16 %v280
      %v311 = vunpack.c.l.b16 %v281
      %v312 = vpack.c.b16 %v311, %v310
      %v314 = vshrl.u32 %v312, 16
      %v316 = vrot.slane %v314, 7
      %v317 = vshll.u32 %v312, 16
      %v319 = vor.u32 %v316, %v317
      %vm321 = vcmask 1040384
      %vm322 = vsmask.f32 256
      %vm323 = vmand %vm321, %vm322
      %v324 = vsel %vm323, 0, %v319
      %v325 = vrot.slane %v317, 1
      %v326 = vor.u32 %v314, %v325
      %vm328 = vcmask 1047552
      %vm329 = vsmask.f32 7424
      %vm330 = vmand %vm328, %vm329
      %v331 = vsel %vm330, %v326, 0
      %332 = vrot.lane.b32.xlu0 %v312, 64
      %v333 = vpop.permute.xlu0 %332
      %vm334 = vcmask 523264
      %v337 = vsel %vm334, %v324, %v333
      %v363 = vunpack.c.l.b16 %v282
      %v364 = vunpack.c.l.b16 %v283
      %v365 = vunpack.c.l.b16 %v284
      %v366 = vunpack.c.l.b16 %v285
      %v367 = vunpack.c.l.b16 %v286
      %v368 = vunpack.c.l.b16 %v287
      %v369 = vunpack.c.l.b16 %v288
      %v370 = vunpack.c.l.b16 %v289
      %v371 = vunpack.c.l.b16 %v290
      %v372 = vunpack.c.l.b16 %v291
      %v373 = vunpack.c.l.b16 %v292
      %v374 = vunpack.c.l.b16 %v293
      %v375 = vunpack.c.l.b16 %v294
      %v376 = vunpack.c.l.b16 %v295
      %v377 = vunpack.c.l.b16 %v296
      %v378 = vunpack.c.l.b16 %v297
      %v379 = vunpack.c.l.b16 %v298
      %v380 = vunpack.c.l.b16 %v299
      %v381 = vunpack.c.l.b16 %v300
      %v382 = vunpack.c.l.b16 %v301
      %v383 = vunpack.c.l.b16 %v302
      %v384 = vunpack.c.l.b16 %v303
      %v385 = vunpack.c.l.b16 %v304
      %v386 = vunpack.c.l.b16 %v305
      %v387 = vpack.c.b16 %v364, %v363
      %v388 = vpack.c.b16 %v366, %v365
      %v389 = vpack.c.b16 %v368, %v367
      %v390 = vpack.c.b16 %v370, %v369
      %v391 = vpack.c.b16 %v372, %v371
      %v392 = vpack.c.b16 %v374, %v373
      %v393 = vpack.c.b16 %v376, %v375
      %v394 = vpack.c.b16 %v378, %v377
      %v395 = vpack.c.b16 %v380, %v379
      %v396 = vpack.c.b16 %v382, %v381
      %v397 = vpack.c.b16 %v384, %v383
      %v398 = vpack.c.b16 %v386, %v385
      %v412 = vsel %vm334, %v331, 0
      %414 = vmatpush.bf16.msra.mxu0 %v394
      %415 = vmatpush.bf16.msra.mxu0 %v393
      %416 = vmatpush.bf16.msra.mxu0 %v392
      %417 = vmatpush.bf16.msra.mxu0 %v391
      %418 = vmatpush.bf16.msra.mxu0 %v390
      %419 = vmatpush.bf16.msra.mxu0 %v389
      %420 = vmatpush.bf16.msra.mxu0 %v388
      %421 = vmatpush.bf16.msra.mxu0 %v387
      %422 = vmatmul.bf16.gmra.mxu0 %v337
      %v423 = vpop.f32.mrf.mxu0
      %v424 = vadd.f32 0.0, %v423
      %v425 = vpop.f32.mrf.mxu0
      %v426 = vadd.f32 0.0, %v425
      %427 = vdwg.mxu0
      %428 = vmatpush.bf16.msra.mxu0 0
      %429 = vmatpush.bf16.msra.mxu0 0
      %430 = vmatpush.bf16.msra.mxu0 0
      %431 = vmatpush.bf16.msra.mxu0 0
      %432 = vmatpush.bf16.msra.mxu0 %v398
      %433 = vmatpush.bf16.msra.mxu0 %v397
      %434 = vmatpush.bf16.msra.mxu0 %v396
      %435 = vmatpush.bf16.msra.mxu0 %v395
      %436 = vmatmul.bf16.gmra.mxu0 %v412
      %v437 = vpop.f32.mrf.mxu0
      %v438 = vadd.f32 %v424, %v437
      %v439 = vpop.f32.mrf.mxu0
      %v440 = vadd.f32 %v426, %v439
      %441 = vdwg.mxu0
      %v443 = vperm.slane %v306, 0
      %v445 = vmul.f32 %v438, %v443
      %v446 = vmul.f32 %v440, %v443
      %v448 = vperm.slane %v307, 0
      %v450 = vadd.f32 %v445, %v448
      %v451 = vadd.f32 %v446, %v448
      %v452 = vmax.f32 %v450, 0.0
      %v453 = vmax.f32 %v451, 0.0
      %v454 = vpack.c.bf16 %v452, %v452
      %v455 = vpack.c.bf16 %v453, %v453
      %v456 = vld [vmem:[%s4] sm:$0xf]
      %v457 = vld [vmem:[%s4 + $0x4] sm:$0xf]
      %v458 = vld [vmem:[%s4 + $0x8] sm:$0xf]
      %v459 = vld [vmem:[%s4 + $0xc] sm:$0xf]
      %v460 = vld [vmem:[%s4 + $0x10] sm:$0xf]
      %v461 = vld [vmem:[%s4 + $0x14] sm:$0xf]
      %v462 = vld [vmem:[%s4 + $0x18] sm:$0xf]
      %v463 = vld [vmem:[%s4 + $0x1c] sm:$0xf]
      %v464 = vld [vmem:[%s4 + $0x20] sm:$0xf]
      %v465 = vld [vmem:[%s4 + $0x24] sm:$0xf]
      %v466 = vld [vmem:[%s4 + $0x28] sm:$0xf]
      %v467 = vld [vmem:[%s4 + $0x2c] sm:$0xf]
      %v468 = vld [vmem:[%s4 + $0x30] sm:$0xf]
      %v469 = vld [vmem:[%s4 + $0x34] sm:$0xf]
      %v470 = vld [vmem:[%s4 + $0x38] sm:$0xf]
      %v471 = vld [vmem:[%s4 + $0x3c] sm:$0xf]
      %v472 = vld [vmem:[%s4 + $0x40] sm:$0xf]
      %v473 = vld [vmem:[%s4 + $0x44] sm:$0xf]
      %v474 = vld [vmem:[%s4 + $0x48] sm:$0xf]
      %v475 = vld [vmem:[%s4 + $0x4c] sm:$0xf]
      %v476 = vld [vmem:[%s4 + $0x50] sm:$0xf]
      %v477 = vld [vmem:[%s4 + $0x54] sm:$0xf]
      %v478 = vld [vmem:[%s4 + $0x58] sm:$0xf]
      %v479 = vld [vmem:[%s4 + $0x5c] sm:$0xf]
      %v480 = vld [vmem:[%s4 + $0x60] sm:$0xf]
      %v481 = vld [vmem:[%s4 + $0x64] sm:$0xf]
      %v482 = vld [vmem:[%s4 + $0x68] sm:$0xf]
      %v483 = vld [vmem:[%s4 + $0x6c] sm:$0xf]
      %v484 = vld [vmem:[%s4 + $0x70] sm:$0xf]
      %v485 = vld [vmem:[%s4 + $0x74] sm:$0xf]
      %v486 = vld [vmem:[%s4 + $0x78] sm:$0xf]
      %v487 = vld [vmem:[%s4 + $0x7c] sm:$0xf]
      %v488 = vld [vmem:[%s4 + $0x80] sm:$0xf]
      %v489 = vld [vmem:[%s4 + $0x84] sm:$0xf]
      %v490 = vld [vmem:[%s4 + $0x88] sm:$0xf]
      %v491 = vld [vmem:[%s4 + $0x8c] sm:$0xf]
      %v492 = vld [vmem:[%s4 + $0x90] sm:$0xf]
      %v493 = vld [vmem:[%s4 + $0x94] sm:$0xf]
      %v494 = vld [vmem:[%s4 + $0x98] sm:$0xf]
      %v495 = vld [vmem:[%s4 + $0x9c] sm:$0xf]
      %v496 = vld [vmem:[%s4 + $0xa0] sm:$0xf]
      %v497 = vld [vmem:[%s4 + $0xa4] sm:$0xf]
      %v498 = vld [vmem:[%s4 + $0xa8] sm:$0xf]
      %v499 = vld [vmem:[%s4 + $0xac] sm:$0xf]
      %v500 = vld [vmem:[%s4 + $0xb0] sm:$0xf]
      %v501 = vld [vmem:[%s4 + $0xb4] sm:$0xf]
      %v502 = vld [vmem:[%s4 + $0xb8] sm:$0xf]
      %v503 = vld [vmem:[%s4 + $0xbc] sm:$0xf]
      %v504 = vld [vmem:[%s5] sm:$0x1]
      %v505 = vld [vmem:[%s6] sm:$0x1]
      %v508 = vunpack.c.l.b16 %v454
      %v509 = vunpack.c.l.b16 %v455
      %v510 = vpack.c.b16 %v509, %v508
      %v512 = vshrl.u32 %v510, 16
      %v514 = vrot.slane %v512, 7
      %v515 = vshll.u32 %v510, 16
      %v517 = vor.u32 %v514, %v515
      %v519 = vsel %vm323, 0, %v517
      %v520 = vrot.slane %v515, 1
      %v521 = vor.u32 %v512, %v520
      %v523 = vsel %vm330, %v521, 0
      %v573 = vunpack.c.l.b16 %v456
      %v574 = vunpack.c.l.b16 %v457
      %v575 = vunpack.c.l.b16 %v458
      %v576 = vunpack.c.l.b16 %v459
      %v577 = vunpack.c.l.b16 %v460
      %v578 = vunpack.c.l.b16 %v461
      %v579 = vunpack.c.l.b16 %v462
      %v580 = vunpack.c.l.b16 %v463
      %v581 = vunpack.c.l.b16 %v464
      %v582 = vunpack.c.l.b16 %v465
      %v583 = vunpack.c.l.b16 %v466
      %v584 = vunpack.c.l.b16 %v467
      %v585 = vunpack.c.l.b16 %v468
      %v586 = vunpack.c.l.b16 %v469
      %v587 = vunpack.c.l.b16 %v470
      %v588 = vunpack.c.l.b16 %v471
      %v589 = vunpack.c.l.b16 %v472
      %v590 = vunpack.c.l.b16 %v473
      %v591 = vunpack.c.l.b16 %v474
      %v592 = vunpack.c.l.b16 %v475
      %v593 = vunpack.c.l.b16 %v476
      %v594 = vunpack.c.l.b16 %v477
      %v595 = vunpack.c.l.b16 %v478
      %v596 = vunpack.c.l.b16 %v479
      %v597 = vunpack.c.l.b16 %v480
      %v598 = vunpack.c.l.b16 %v481
      %v599 = vunpack.c.l.b16 %v482
      %v600 = vunpack.c.l.b16 %v483
      %v601 = vunpack.c.l.b16 %v484
      %v602 = vunpack.c.l.b16 %v485
      %v603 = vunpack.c.l.b16 %v486
      %v604 = vunpack.c.l.b16 %v487
      %v605 = vunpack.c.l.b16 %v488
      %v606 = vunpack.c.l.b16 %v489
      %v607 = vunpack.c.l.b16 %v490
      %v608 = vunpack.c.l.b16 %v491
      %v609 = vunpack.c.l.b16 %v492
      %v610 = vunpack.c.l.b16 %v493
      %v611 = vunpack.c.l.b16 %v494
      %v612 = vunpack.c.l.b16 %v495
      %v613 = vunpack.c.l.b16 %v496
      %v614 = vunpack.c.l.b16 %v497
      %v615 = vunpack.c.l.b16 %v498
      %v616 = vunpack.c.l.b16 %v499
      %v617 = vunpack.c.l.b16 %v500
      %v618 = vunpack.c.l.b16 %v501
      %v619 = vunpack.c.l.b16 %v502
      %v620 = vunpack.c.l.b16 %v503
      %v621 = vpack.c.b16 %v574, %v573
      %v622 = vpack.c.b16 %v576, %v575
      %v623 = vpack.c.b16 %v578, %v577
      %v624 = vpack.c.b16 %v580, %v579
      %v625 = vpack.c.b16 %v582, %v581
      %v626 = vpack.c.b16 %v584, %v583
      %v627 = vpack.c.b16 %v586, %v585
      %v628 = vpack.c.b16 %v588, %v587
      %v629 = vpack.c.b16 %v590, %v589
      %v630 = vpack.c.b16 %v592, %v591
      %v631 = vpack.c.b16 %v594, %v593
      %v632 = vpack.c.b16 %v596, %v595
      %v633 = vpack.c.b16 %v598, %v597
      %v634 = vpack.c.b16 %v600, %v599
      %v635 = vpack.c.b16 %v602, %v601
      %v636 = vpack.c.b16 %v604, %v603
      %v637 = vpack.c.b16 %v606, %v605
      %v638 = vpack.c.b16 %v608, %v607
      %v639 = vpack.c.b16 %v610, %v609
      %v640 = vpack.c.b16 %v612, %v611
      %v641 = vpack.c.b16 %v614, %v613
      %v642 = vpack.c.b16 %v616, %v615
      %v643 = vpack.c.b16 %v618, %v617
      %v644 = vpack.c.b16 %v620, %v619
      %669 = vmatpush.bf16.msra.mxu0 %v628
      %670 = vmatpush.bf16.msra.mxu0 %v627
      %671 = vmatpush.bf16.msra.mxu0 %v626
      %672 = vmatpush.bf16.msra.mxu0 %v625
      %673 = vmatpush.bf16.msra.mxu0 %v624
      %674 = vmatpush.bf16.msra.mxu0 %v623
      %675 = vmatpush.bf16.msra.mxu0 %v622
      %676 = vmatpush.bf16.msra.mxu0 %v621
      %677 = vmatmul.bf16.gmra.mxu0 %v519
      %v678 = vpop.f32.mrf.mxu0
      %v679 = vadd.f32 0.0, %v678
      %v680 = vpop.f32.mrf.mxu0
      %v681 = vadd.f32 0.0, %v680
      %682 = vdwg.mxu0
      %683 = vmatpush.bf16.msra.mxu0 %v636
      %684 = vmatpush.bf16.msra.mxu0 %v635
      %685 = vmatpush.bf16.msra.mxu0 %v634
      %686 = vmatpush.bf16.msra.mxu0 %v633
      %687 = vmatpush.bf16.msra.mxu0 %v632
      %688 = vmatpush.bf16.msra.mxu0 %v631
      %689 = vmatpush.bf16.msra.mxu0 %v630
      %690 = vmatpush.bf16.msra.mxu0 %v629
      %691 = vmatmul.bf16.gmra.mxu0 %v510
      %v692 = vpop.f32.mrf.mxu0
      %v693 = vadd.f32 %v679, %v692
      %v694 = vpop.f32.mrf.mxu0
      %v695 = vadd.f32 %v681, %v694
      %696 = vdwg.mxu0
      %697 = vmatpush.bf16.msra.mxu0 %v644
      %698 = vmatpush.bf16.msra.mxu0 %v643
      %699 = vmatpush.bf16.msra.mxu0 %v642
      %700 = vmatpush.bf16.msra.mxu0 %v641
      %701 = vmatpush.bf16.msra.mxu0 %v640
      %702 = vmatpush.bf16.msra.mxu0 %v639
      %703 = vmatpush.bf16.msra.mxu0 %v638
      %704 = vmatpush.bf16.msra.mxu0 %v637
      %705 = vmatmul.bf16.gmra.mxu0 %v523
      %v706 = vpop.f32.mrf.mxu0
      %v707 = vadd.f32 %v693, %v706
      %v708 = vpop.f32.mrf.mxu0
      %v709 = vadd.f32 %v695, %v708
      %710 = vdwg.mxu0
      %v712 = vperm.slane %v504, 0
      %v714 = vmul.f32 %v707, %v712
      %v715 = vmul.f32 %v709, %v712
      %v717 = vperm.slane %v505, 0
      %v719 = vadd.f32 %v714, %v717
      %v720 = vadd.f32 %v715, %v717
      %v721 = vmax.f32 %v719, 0.0
      %v722 = vmax.f32 %v720, 0.0
      %723 = vst [vmem:[%s278] sm:$0xff] %v721
      %724 = vst [vmem:[%s278 + $0x8] sm:$0xff] %v722
      %p725 = scmp.lt.s32.totalorder %s18, 1
      %s726 = scalar_select %p725, %s18, 1
      %s727 = smul.addr %s726, 2
      %s728 = smul.addr %s727, 8
      %s729 = scalar_lea.vmem %s7, %s728
      // Predicated region
      $region49: #{conv_block_forward.1} parent=47 // pred_check
        %p730 = pneg %p188
      $region50: #{conv_block_forward.1} parent=47 // pred_check_branch
        %732 = sbr.rel (%p730) target = $region52
      $region51: #{conv_block_forward.1} parent=47 // pred_region
        _
      $region52: #{conv_block_forward.1} parent=47 // pred_fallthru
        _
    $region48: #{conv_block_forward.1} parent=5 // pred_fallthru
      _
    %p733 = scmp.le.s32.totalorder 2, %s13
    // Predicated region
    $region53: #{conv_block_forward.1} parent=5 // pred_check
      %p734 = pneg %p733
    $region54: #{conv_block_forward.1} parent=5 // pred_check_branch
      %736 = sbr.rel (%p734) target = $region56
    $region55: #{conv_block_forward.1} parent=5 // pred_region
      %s737 = ssub.s32 %s13, 2
      // Predicated region
      $region57: #{conv_block_forward.1} parent=55 // pred_check
        %p738 = pneg %p194
      $region58: #{conv_block_forward.1} parent=55 // pred_check_branch
        %740 = sbr.rel (%p738) target = $region60
      $region59: #{conv_block_forward.1} parent=55 // pred_region
        %p741 = scmp.lt.s32.totalorder %s19, 1
        %s742 = scalar_select %p741, %s19, 1
        %s743 = smul.addr %s742, 2
        %s744 = smul.addr %s743, 8
        %s745 = scalar_lea.vmem %s7, %s744
      $region60: #{conv_block_forward.1} parent=55 // pred_fallthru
        _
    $region56: #{conv_block_forward.1} parent=5 // pred_fallthru
      _
  $region6: #{conv_block_forward.1} parent=0 // loop_footer
    %s17 = sadd.s32 1, %s13
  $region7: #{conv_block_forward.1} parent=0 // loop_footer_branch
    %12 = sbr.rel target = $region3
  $region8: #{conv_block_forward.1} parent=0 // loop_exit
    _

</llo_original>
